<compile_context>
chip_gen: v5e
topology: v5e:2x2
jax: 0.10.0
libtpu: 0.0.40
codegen_flags: <defaults>
</compile_context>

<pallas_src>
import functools

import jax
import jax.numpy as jnp
from jax.experimental import pallas as pl
from jax.experimental.pallas import tpu as pltpu

STATE_DIM = 4        # CartPole-v1 observation_space.shape[0]
HIDDEN_DIM = 128
ACTION_DIM = 2       # CartPole-v1 action_space.n
OUT_SUB = 8          # ACTION_DIM padded up to one sublane group


def _round_up(n, m):
    return ((n + m - 1) // m) * m


def qnet_kernel(xT_ref, w1t_ref, b1t_ref, w2t_ref, b2t_ref, out_ref):
    # xT_ref : (STATE_DIM, tb)        f32   -- batch on lanes
    # w1t_ref: (HIDDEN_DIM, STATE_DIM) f32  -- resident
    # b1t_ref: (HIDDEN_DIM, 1)         f32  -- resident
    # w2t_ref: (OUT_SUB, HIDDEN_DIM)   bf16 -- resident, rows >= ACTION_DIM are zero
    # b2t_ref: (OUT_SUB, 1)            f32  -- resident
    # out_ref: (OUT_SUB, tb)           f32  -- lane-dense along batch
    xT = xT_ref[...]
    w1t = w1t_ref[...]

    # fc1 (transposed): h^T[H, tb] = W1^T @ x^T as STATE_DIM broadcast FMAs on the
    # VPU (MXU would be <4% utilized for a K=4 contraction). Kept in f32 (v5e has
    # no bf16 VALU path).
    h = w1t[:, 0:1] * xT[0:1, :]
    for k in range(1, STATE_DIM):
        h = h + w1t[:, k:k + 1] * xT[k:k + 1, :]
    h = jnp.maximum(h + b1t_ref[...], 0.0)

    # fc2 (transposed) on the MXU: (8,128) bf16 @ (128,tb) bf16 -> (8,tb) f32.
    y = jnp.dot(w2t_ref[...], h.astype(jnp.bfloat16),
                preferred_element_type=jnp.float32)
    out_ref[...] = y + b2t_ref[...]


def _pick_batch_tile(B, batch_tile):
    batch_tile = max(128, _round_up(batch_tile, 128))
    b128 = _round_up(max(B, 1), 128)          # lane-aligned batch
    tb = min(batch_tile, b128)
    # v7x has 2 TensorCores: keep >= 2 grid steps whenever the batch spans >= 2
    # lane tiles so the "parallel" axis actually shards.
    if b128 // tb < 2 and b128 >= 256:
        tb = _round_up(b128 // 2, 128)
    b_pad = _round_up(b128, tb)
    return tb, b_pad


@functools.partial(jax.jit, static_argnames=("batch_tile",))
def qnet_forward(x, w1t, b1t, w2t, b2t, *, batch_tile=4096):
    """x: (B, state_dim) f32; packed params from pack_params; returns (B, action_dim) f32."""
    B = x.shape[0]
    tb, b_pad = _pick_batch_tile(B, batch_tile)

    # Transposed, lane-padded input: (STATE_DIM, b_pad). Padded batch columns are
    # zero; they produce garbage logits that are sliced off below.
    xT = jnp.pad(x.T, ((0, 0), (0, b_pad - B)))

    flops = 2 * b_pad * (STATE_DIM * HIDDEN_DIM + HIDDEN_DIM * ACTION_DIM)
    bytes_accessed = (STATE_DIM * b_pad * 4            # xT in
                      + OUT_SUB * b_pad * 4            # out
                      + HIDDEN_DIM * STATE_DIM * 4     # w1t
                      + HIDDEN_DIM * 4                 # b1t
                      + OUT_SUB * HIDDEN_DIM * 2       # w2t (bf16)
                      + OUT_SUB * 4)                   # b2t

    out_t = pl.pallas_call(
        qnet_kernel,
        out_shape=jax.ShapeDtypeStruct((OUT_SUB, b_pad), jnp.float32),
        grid=(b_pad // tb,),
        in_specs=[
            pl.BlockSpec((STATE_DIM, tb), lambda i: (0, i)),            # xT: tiled over batch lanes
            pl.BlockSpec((HIDDEN_DIM, STATE_DIM), lambda i: (0, 0)),    # w1t: resident
            pl.BlockSpec((HIDDEN_DIM, 1), lambda i: (0, 0)),            # b1t: resident
            pl.BlockSpec((OUT_SUB, HIDDEN_DIM), lambda i: (0, 0)),      # w2t: resident
            pl.BlockSpec((OUT_SUB, 1), lambda i: (0, 0)),               # b2t: resident
        ],
        out_specs=pl.BlockSpec((OUT_SUB, tb), lambda i: (0, i)),
        compiler_params=pltpu.CompilerParams(
            dimension_semantics=("parallel",)),
        cost_estimate=pl.CostEstimate(
            flops=flops, transcendentals=0, bytes_accessed=bytes_accessed),
    )(xT, w1t, b1t, w2t, b2t)

    # Trivial view/copy on a tiny (ACTION_DIM, B) array; no 128-wide padded slab.
    return out_t[:ACTION_DIM, :B].T


def pack_params(w1, b1, w2, b2):
    """One-time conversion of math-layout params to the kernel layout
    (transpose, sublane-pad fc2 to OUT_SUB, cast w2 to bf16)."""
    w1t = w1.T.astype(jnp.float32)                              # (H, S)
    b1t = b1.reshape(HIDDEN_DIM, 1).astype(jnp.float32)         # (H, 1)
    w2t = jnp.zeros((OUT_SUB, HIDDEN_DIM), jnp.bfloat16)
    w2t = w2t.at[:ACTION_DIM, :].set(w2.T.astype(jnp.bfloat16))  # (8, H)
    b2t = jnp.zeros((OUT_SUB, 1), jnp.float32)
    b2t = b2t.at[:ACTION_DIM, 0].set(b2.reshape(-1))             # (8, 1)
    return w1t, b1t, w2t, b2t


def init_params(key):
    """Deterministic init mimicking PyTorch nn.Linear default:
    U(-1/sqrt(fan_in), 1/sqrt(fan_in)) for both weight and bias.
    Stored as (in, out) so math is y = x @ W + b."""
    k1, k2, k3, k4 = jax.random.split(key, 4)
    bound1 = 1.0 / jnp.sqrt(STATE_DIM)
    bound2 = 1.0 / jnp.sqrt(HIDDEN_DIM)
    w1 = jax.random.uniform(k1, (STATE_DIM, HIDDEN_DIM), jnp.float32, -bound1, bound1)
    b1 = jax.random.uniform(k2, (HIDDEN_DIM,), jnp.float32, -bound1, bound1)
    w2 = jax.random.uniform(k3, (HIDDEN_DIM, ACTION_DIM), jnp.float32, -bound2, bound2)
    b2 = jax.random.uniform(k4, (ACTION_DIM,), jnp.float32, -bound2, bound2)
    return w1, b1, w2, b2


def _reference(x, w1, b1, w2, b2):
    # Matches kernel numerics: fc1/ReLU in f32, fc2 bf16 inputs + f32 accumulate.
    h = jnp.maximum(x @ w1 + b1, 0.0)
    y = jnp.dot(h.astype(jnp.bfloat16), w2.astype(jnp.bfloat16),
                preferred_element_type=jnp.float32)
    return y + b2


if __name__ == "__main__":
    key = jax.random.PRNGKey(0)
    k_params, k_x1, k_x2 = jax.random.split(key, 3)
    w1, b1, w2, b2 = init_params(k_params)
    packed = pack_params(w1, b1, w2, b2)

    # --- small batch (single tile) ---
    B = 8
    x = jax.random.normal(k_x1, (B, STATE_DIM), jnp.float32)
    out = jax.block_until_ready(qnet_forward(x, *packed))
    ref = _reference(x, w1, b1, w2, b2)
    assert out.shape == (B, ACTION_DIM)
    assert jnp.allclose(out, ref, atol=2e-2, rtol=2e-2), \
        f"max err {jnp.max(jnp.abs(out - ref))}"

    # --- larger batch exercising batch padding + >=2 grid steps ---
    B2 = 300
    x2 = jax.random.normal(k_x2, (B2, STATE_DIM), jnp.float32)
    out2 = jax.block_until_ready(qnet_forward(x2, *packed))
    ref2 = _reference(x2, w1, b1, w2, b2)
    assert out2.shape == (B2, ACTION_DIM)
    assert jnp.allclose(out2, ref2, atol=2e-2, rtol=2e-2), \
        f"max err {jnp.max(jnp.abs(out2 - ref2))}"

    print("KERNEL_OK")
</pallas_src>

<mosaic_0001>
module attributes {stable_mosaic.version = 11 : i64} {
  func.func @qnet_kernel(%arg0: i32, %arg1: memref<4x128xf32, #tpu.memory_space<vmem>>, %arg2: memref<128x4xf32, #tpu.memory_space<vmem>>, %arg3: memref<128x1xf32, #tpu.memory_space<vmem>>, %arg4: memref<8x128xbf16, #tpu.memory_space<vmem>>, %arg5: memref<8x1xf32, #tpu.memory_space<vmem>>, %arg6: memref<8x128xf32, #tpu.memory_space<vmem>>) attributes {dimension_semantics = [#tpu.dimension_semantics<parallel>], iteration_bounds = array<i64: 1>, scalar_prefetch = 0 : i64, scratch_operands = 0 : i64, tpu.core_type = #tpu.core_type<tc>, window_params = [{transform_indices = @transform_0, window_bounds = array<i64: 4, 128>}, {pipeline_mode = #tpu.pipeline_mode<synchronous>, transform_indices = @transform_1, window_bounds = array<i64: 128, 4>}, {pipeline_mode = #tpu.pipeline_mode<synchronous>, transform_indices = @transform_2, window_bounds = array<i64: 128, 1>}, {pipeline_mode = #tpu.pipeline_mode<synchronous>, transform_indices = @transform_3, window_bounds = array<i64: 8, 128>}, {pipeline_mode = #tpu.pipeline_mode<synchronous>, transform_indices = @transform_4, window_bounds = array<i64: 8, 1>}, {transform_indices = @transform_5, window_bounds = array<i64: 8, 128>}]} {
    %c0 = arith.constant 0 : index
    %c0_0 = arith.constant 0 : index
    %0 = vector.load %arg1[%c0, %c0_0] : memref<4x128xf32, #tpu.memory_space<vmem>>, vector<4x128xf32>
    %c0_1 = arith.constant 0 : index
    %c0_2 = arith.constant 0 : index
    %1 = vector.load %arg2[%c0_1, %c0_2] : memref<128x4xf32, #tpu.memory_space<vmem>>, vector<128x4xf32>
    %2 = vector.extract_strided_slice %1 {offsets = [0, 0], sizes = [128, 1], strides = [1, 1]} : vector<128x4xf32> to vector<128x1xf32>
    %3 = vector.extract_strided_slice %0 {offsets = [0, 0], sizes = [1, 128], strides = [1, 1]} : vector<4x128xf32> to vector<1x128xf32>
    %4 = vector.broadcast %2 : vector<128x1xf32> to vector<128x128xf32>
    %5 = vector.broadcast %3 : vector<1x128xf32> to vector<128x128xf32>
    %6 = arith.mulf %4, %5 : vector<128x128xf32>
    %7 = vector.extract_strided_slice %1 {offsets = [0, 1], sizes = [128, 1], strides = [1, 1]} : vector<128x4xf32> to vector<128x1xf32>
    %8 = vector.extract_strided_slice %0 {offsets = [1, 0], sizes = [1, 128], strides = [1, 1]} : vector<4x128xf32> to vector<1x128xf32>
    %9 = vector.broadcast %7 : vector<128x1xf32> to vector<128x128xf32>
    %10 = vector.broadcast %8 : vector<1x128xf32> to vector<128x128xf32>
    %11 = arith.mulf %9, %10 : vector<128x128xf32>
    %12 = arith.addf %6, %11 : vector<128x128xf32>
    %13 = vector.extract_strided_slice %1 {offsets = [0, 2], sizes = [128, 1], strides = [1, 1]} : vector<128x4xf32> to vector<128x1xf32>
    %14 = vector.extract_strided_slice %0 {offsets = [2, 0], sizes = [1, 128], strides = [1, 1]} : vector<4x128xf32> to vector<1x128xf32>
    %15 = vector.broadcast %13 : vector<128x1xf32> to vector<128x128xf32>
    %16 = vector.broadcast %14 : vector<1x128xf32> to vector<128x128xf32>
    %17 = arith.mulf %15, %16 : vector<128x128xf32>
    %18 = arith.addf %12, %17 : vector<128x128xf32>
    %19 = vector.extract_strided_slice %1 {offsets = [0, 3], sizes = [128, 1], strides = [1, 1]} : vector<128x4xf32> to vector<128x1xf32>
    %20 = vector.extract_strided_slice %0 {offsets = [3, 0], sizes = [1, 128], strides = [1, 1]} : vector<4x128xf32> to vector<1x128xf32>
    %21 = vector.broadcast %19 : vector<128x1xf32> to vector<128x128xf32>
    %22 = vector.broadcast %20 : vector<1x128xf32> to vector<128x128xf32>
    %23 = arith.mulf %21, %22 : vector<128x128xf32>
    %24 = arith.addf %18, %23 : vector<128x128xf32>
    %c0_3 = arith.constant 0 : index
    %c0_4 = arith.constant 0 : index
    %25 = vector.load %arg3[%c0_3, %c0_4] : memref<128x1xf32, #tpu.memory_space<vmem>>, vector<128x1xf32>
    %26 = vector.broadcast %25 : vector<128x1xf32> to vector<128x128xf32>
    %27 = arith.addf %24, %26 : vector<128x128xf32>
    %cst = arith.constant 0.000000e+00 : f32
    %28 = vector.broadcast %cst : f32 to vector<128x128xf32>
    %29 = arith.maximumf %27, %28 : vector<128x128xf32>
    %c0_5 = arith.constant 0 : index
    %c0_6 = arith.constant 0 : index
    %30 = vector.load %arg4[%c0_5, %c0_6] : memref<8x128xbf16, #tpu.memory_space<vmem>>, vector<8x128xbf16>
    %31 = arith.truncf %29 : vector<128x128xf32> to vector<128x128xbf16>
    %cst_7 = arith.constant dense<0.000000e+00> : vector<8x128xf32>
    %32 = tpu.matmul %30, %31, %cst_7 {dimension_numbers = #tpu.dot_dimension_numbers<[1], [0], [0], [1], [0, 0, 1, 1], [], []>} : vector<8x128xbf16>, vector<128x128xbf16>, vector<8x128xf32> -> vector<8x128xf32>
    %c0_8 = arith.constant 0 : index
    %c0_9 = arith.constant 0 : index
    %33 = vector.load %arg5[%c0_8, %c0_9] : memref<8x1xf32, #tpu.memory_space<vmem>>, vector<8x1xf32>
    %34 = vector.broadcast %33 : vector<8x1xf32> to vector<8x128xf32>
    %35 = arith.addf %32, %34 : vector<8x128xf32>
    %c0_10 = arith.constant 0 : index
    %c0_11 = arith.constant 0 : index
    %36 = vector.load %arg6[%c0_10, %c0_11] : memref<8x128xf32, #tpu.memory_space<vmem>>, vector<8x128xf32>
    tpu.vector_store %arg6[%c0_10, %c0_11], %35 {strides = array<i32>} : memref<8x128xf32, #tpu.memory_space<vmem>>, vector<8x128xf32>,
    return
  }
  func.func @transform_0(%arg0: i32) -> (i32, i32) {
    %c0_i32 = arith.constant 0 : i32
    %c0_i32_0 = arith.constant 0 : i32
    return %c0_i32, %arg0 : i32, i32
  }
  func.func @transform_1(%arg0: i32) -> (i32, i32) {
    %c0_i32 = arith.constant 0 : i32
    %c0_i32_0 = arith.constant 0 : i32
    %c0_i32_1 = arith.constant 0 : i32
    return %c0_i32, %c0_i32_0 : i32, i32
  }
  func.func @transform_2(%arg0: i32) -> (i32, i32) {
    %c0_i32 = arith.constant 0 : i32
    %c0_i32_0 = arith.constant 0 : i32
    %c0_i32_1 = arith.constant 0 : i32
    return %c0_i32, %c0_i32_0 : i32, i32
  }
  func.func @transform_3(%arg0: i32) -> (i32, i32) {
    %c0_i32 = arith.constant 0 : i32
    %c0_i32_0 = arith.constant 0 : i32
    %c0_i32_1 = arith.constant 0 : i32
    return %c0_i32, %c0_i32_0 : i32, i32
  }
  func.func @transform_4(%arg0: i32) -> (i32, i32) {
    %c0_i32 = arith.constant 0 : i32
    %c0_i32_0 = arith.constant 0 : i32
    %c0_i32_1 = arith.constant 0 : i32
    return %c0_i32, %c0_i32_0 : i32, i32
  }
  func.func @transform_5(%arg0: i32) -> (i32, i32) {
    %c0_i32 = arith.constant 0 : i32
    %c0_i32_0 = arith.constant 0 : i32
    return %c0_i32, %arg0 : i32, i32
  }
}

</mosaic_0001>

<llo_original>
// kernel: qnet_forward.1
$region0: #{qnet_forward.1}
  #allocation0 [shape = 'u32[]', space=smem, size = 0x4, offset = 0x4, fixed_abs, tag = 'smem constant byte address 0x4 - core index']
  #allocation1 [shape = 'u32[72,128]{1,0:T(1,128)}', space=vmem, size = 0x9000, scoped, tag = 'internal scratch']
  %s0 = inlined_call_operand.vmem [shape: f32[4,128], index: 0, kind: input, shape index: {}]
  %s1 = inlined_call_operand.vmem [shape: f32[128,4], index: 1, kind: input, shape index: {}]
  %s2 = inlined_call_operand.vmem [shape: f32[128,1], index: 2, kind: input, shape index: {}]
  %s3 = inlined_call_operand.vmem [shape: bf16[8,128], index: 3, kind: input, shape index: {}]
  %s4 = inlined_call_operand.vmem [shape: f32[8,1], index: 4, kind: input, shape index: {}]
  %s5 = inlined_call_operand.vmem [shape: f32[8,128], index: 5, kind: output, shape index: {}]
  %s6 = sld [smem:[#allocation0]]
  $region30: #{qnet_forward.1} parent=0
    _
  %s8 = ssub.s32 1, %s6
  %s9 = scalar_select 0, %s8, %s6
  // Predicated region
  $region2: #{qnet_forward.1} parent=0 // pred_check
    _
  $region3: #{qnet_forward.1} parent=0 // pred_check_branch
    %11 = sbr.rel (0) target = $region5
  $region4: #{qnet_forward.1} parent=0 // pred_region
    _
  $region5: #{qnet_forward.1} parent=0 // pred_fallthru
    _
  // Predicated region
  $region6: #{qnet_forward.1} parent=0 // pred_check
    _
  $region7: #{qnet_forward.1} parent=0 // pred_check_branch
    %13 = sbr.rel (0) target = $region9
  $region8: #{qnet_forward.1} parent=0 // pred_region
    _
  $region9: #{qnet_forward.1} parent=0 // pred_fallthru
    _
  // Predicated region
  $region10: #{qnet_forward.1} parent=0 // pred_check
    _
  $region11: #{qnet_forward.1} parent=0 // pred_check_branch
    %15 = sbr.rel (0) target = $region13
  $region12: #{qnet_forward.1} parent=0 // pred_region
    _
  $region13: #{qnet_forward.1} parent=0 // pred_fallthru
    _
  // Predicated region
  $region14: #{qnet_forward.1} parent=0 // pred_check
    _
  $region15: #{qnet_forward.1} parent=0 // pred_check_branch
    %17 = sbr.rel (0) target = $region17
  $region16: #{qnet_forward.1} parent=0 // pred_region
    _
  $region17: #{qnet_forward.1} parent=0 // pred_fallthru
    _
  // Predicated region
  $region18: #{qnet_forward.1} parent=0 // pred_check
    _
  $region19: #{qnet_forward.1} parent=0 // pred_check_branch
    %19 = sbr.rel (0) target = $region21
  $region20: #{qnet_forward.1} parent=0 // pred_region
    _
  $region21: #{qnet_forward.1} parent=0 // pred_fallthru
    _
  %v20 = vld [vmem:[%s0] sm:$0xf]
  %v21 = vld [vmem:[%s1] sm:$0xff]
  %v22 = vld [vmem:[%s1 + $0x8] sm:$0xff]
  %v23 = vld [vmem:[%s1 + $0x10] sm:$0xff]
  %v24 = vld [vmem:[%s1 + $0x18] sm:$0xff]
  %v25 = vld [vmem:[%s1 + $0x20] sm:$0xff]
  %v26 = vld [vmem:[%s1 + $0x28] sm:$0xff]
  %v27 = vld [vmem:[%s1 + $0x30] sm:$0xff]
  %v28 = vld [vmem:[%s1 + $0x38] sm:$0xff]
  %v29 = vld [vmem:[%s1 + $0x40] sm:$0xff]
  %v30 = vld [vmem:[%s1 + $0x48] sm:$0xff]
  %v31 = vld [vmem:[%s1 + $0x50] sm:$0xff]
  %v32 = vld [vmem:[%s1 + $0x58] sm:$0xff]
  %v33 = vld [vmem:[%s1 + $0x60] sm:$0xff]
  %v34 = vld [vmem:[%s1 + $0x68] sm:$0xff]
  %v35 = vld [vmem:[%s1 + $0x70] sm:$0xff]
  %v36 = vld [vmem:[%s1 + $0x78] sm:$0xff]
  %38 = vset.pattern.permute.xlu0 0
  %39 = vperm.xlu0 %38, %v21
  %v40 = vpop.permute.xlu0 %39
  %43 = vset.pattern.permute.xlu0 0
  %44 = vperm.xlu0 %43, %v22
  %v45 = vpop.permute.xlu0 %44
  %48 = vset.pattern.permute.xlu0 0
  %49 = vperm.xlu0 %48, %v23
  %v50 = vpop.permute.xlu0 %49
  %53 = vset.pattern.permute.xlu0 0
  %54 = vperm.xlu0 %53, %v24
  %v55 = vpop.permute.xlu0 %54
  %58 = vset.pattern.permute.xlu0 0
  %59 = vperm.xlu0 %58, %v25
  %v60 = vpop.permute.xlu0 %59
  %63 = vset.pattern.permute.xlu0 0
  %64 = vperm.xlu0 %63, %v26
  %v65 = vpop.permute.xlu0 %64
  %68 = vset.pattern.permute.xlu0 0
  %69 = vperm.xlu0 %68, %v27
  %v70 = vpop.permute.xlu0 %69
  %73 = vset.pattern.permute.xlu0 0
  %74 = vperm.xlu0 %73, %v28
  %v75 = vpop.permute.xlu0 %74
  %78 = vset.pattern.permute.xlu0 0
  %79 = vperm.xlu0 %78, %v29
  %v80 = vpop.permute.xlu0 %79
  %83 = vset.pattern.permute.xlu0 0
  %84 = vperm.xlu0 %83, %v30
  %v85 = vpop.permute.xlu0 %84
  %88 = vset.pattern.permute.xlu0 0
  %89 = vperm.xlu0 %88, %v31
  %v90 = vpop.permute.xlu0 %89
  %93 = vset.pattern.permute.xlu0 0
  %94 = vperm.xlu0 %93, %v32
  %v95 = vpop.permute.xlu0 %94
  %98 = vset.pattern.permute.xlu0 0
  %99 = vperm.xlu0 %98, %v33
  %v100 = vpop.permute.xlu0 %99
  %103 = vset.pattern.permute.xlu0 0
  %104 = vperm.xlu0 %103, %v34
  %v105 = vpop.permute.xlu0 %104
  %108 = vset.pattern.permute.xlu0 0
  %109 = vperm.xlu0 %108, %v35
  %v110 = vpop.permute.xlu0 %109
  %113 = vset.pattern.permute.xlu0 0
  %114 = vperm.xlu0 %113, %v36
  %v115 = vpop.permute.xlu0 %114
  %v117 = vperm.slane %v20, 0
  %v118 = vmul.f32 %v40, %v117
  %v119 = vmul.f32 %v45, %v117
  %v120 = vmul.f32 %v50, %v117
  %v121 = vmul.f32 %v55, %v117
  %v122 = vmul.f32 %v60, %v117
  %v123 = vmul.f32 %v65, %v117
  %v124 = vmul.f32 %v70, %v117
  %v125 = vmul.f32 %v75, %v117
  %v126 = vmul.f32 %v80, %v117
  %v127 = vmul.f32 %v85, %v117
  %v128 = vmul.f32 %v90, %v117
  %v129 = vmul.f32 %v95, %v117
  %v130 = vmul.f32 %v100, %v117
  %v131 = vmul.f32 %v105, %v117
  %v132 = vmul.f32 %v110, %v117
  %v133 = vmul.f32 %v115, %v117
  %134 = vset.pattern.permute.xlu0 1
  %135 = vperm.xlu0 %134, %v21
  %v136 = vpop.permute.xlu0 %135
  %138 = vset.pattern.permute.xlu0 1
  %139 = vperm.xlu0 %138, %v22
  %v140 = vpop.permute.xlu0 %139
  %142 = vset.pattern.permute.xlu0 1
  %143 = vperm.xlu0 %142, %v23
  %v144 = vpop.permute.xlu0 %143
  %146 = vset.pattern.permute.xlu0 1
  %147 = vperm.xlu0 %146, %v24
  %v148 = vpop.permute.xlu0 %147
  %150 = vset.pattern.permute.xlu0 1
  %151 = vperm.xlu0 %150, %v25
  %v152 = vpop.permute.xlu0 %151
  %154 = vset.pattern.permute.xlu0 1
  %155 = vperm.xlu0 %154, %v26
  %v156 = vpop.permute.xlu0 %155
  %158 = vset.pattern.permute.xlu0 1
  %159 = vperm.xlu0 %158, %v27
  %v160 = vpop.permute.xlu0 %159
  %162 = vset.pattern.permute.xlu0 1
  %163 = vperm.xlu0 %162, %v28
  %v164 = vpop.permute.xlu0 %163
  %166 = vset.pattern.permute.xlu0 1
  %167 = vperm.xlu0 %166, %v29
  %v168 = vpop.permute.xlu0 %167
  %170 = vset.pattern.permute.xlu0 1
  %171 = vperm.xlu0 %170, %v30
  %v172 = vpop.permute.xlu0 %171
  %174 = vset.pattern.permute.xlu0 1
  %175 = vperm.xlu0 %174, %v31
  %v176 = vpop.permute.xlu0 %175
  %178 = vset.pattern.permute.xlu0 1
  %179 = vperm.xlu0 %178, %v32
  %v180 = vpop.permute.xlu0 %179
  %182 = vset.pattern.permute.xlu0 1
  %183 = vperm.xlu0 %182, %v33
  %v184 = vpop.permute.xlu0 %183
  %186 = vset.pattern.permute.xlu0 1
  %187 = vperm.xlu0 %186, %v34
  %v188 = vpop.permute.xlu0 %187
  %190 = vset.pattern.permute.xlu0 1
  %191 = vperm.xlu0 %190, %v35
  %v192 = vpop.permute.xlu0 %191
  %194 = vset.pattern.permute.xlu0 1
  %195 = vperm.xlu0 %194, %v36
  %v196 = vpop.permute.xlu0 %195
  %v198 = vperm.slane %v20, 1
  %v199 = vmul.f32 %v136, %v198
  %v200 = vmul.f32 %v140, %v198
  %v201 = vmul.f32 %v144, %v198
  %v202 = vmul.f32 %v148, %v198
  %v203 = vmul.f32 %v152, %v198
  %v204 = vmul.f32 %v156, %v198
  %v205 = vmul.f32 %v160, %v198
  %v206 = vmul.f32 %v164, %v198
  %v207 = vmul.f32 %v168, %v198
  %v208 = vmul.f32 %v172, %v198
  %v209 = vmul.f32 %v176, %v198
  %v210 = vmul.f32 %v180, %v198
  %v211 = vmul.f32 %v184, %v198
  %v212 = vmul.f32 %v188, %v198
  %v213 = vmul.f32 %v192, %v198
  %v214 = vmul.f32 %v196, %v198
  %v215 = vadd.f32 %v118, %v199
  %v216 = vadd.f32 %v119, %v200
  %v217 = vadd.f32 %v120, %v201
  %v218 = vadd.f32 %v121, %v202
  %v219 = vadd.f32 %v122, %v203
  %v220 = vadd.f32 %v123, %v204
  %v221 = vadd.f32 %v124, %v205
  %v222 = vadd.f32 %v125, %v206
  %v223 = vadd.f32 %v126, %v207
  %v224 = vadd.f32 %v127, %v208
  %v225 = vadd.f32 %v128, %v209
  %v226 = vadd.f32 %v129, %v210
  %v227 = vadd.f32 %v130, %v211
  %v228 = vadd.f32 %v131, %v212
  %v229 = vadd.f32 %v132, %v213
  %v230 = vadd.f32 %v133, %v214
  %231 = vset.pattern.permute.xlu0 2
  %232 = vperm.xlu0 %231, %v21
  %v233 = vpop.permute.xlu0 %232
  %235 = vset.pattern.permute.xlu0 2
  %236 = vperm.xlu0 %235, %v22
  %v237 = vpop.permute.xlu0 %236
  %239 = vset.pattern.permute.xlu0 2
  %240 = vperm.xlu0 %239, %v23
  %v241 = vpop.permute.xlu0 %240
  %243 = vset.pattern.permute.xlu0 2
  %244 = vperm.xlu0 %243, %v24
  %v245 = vpop.permute.xlu0 %244
  %247 = vset.pattern.permute.xlu0 2
  %248 = vperm.xlu0 %247, %v25
  %v249 = vpop.permute.xlu0 %248
  %251 = vset.pattern.permute.xlu0 2
  %252 = vperm.xlu0 %251, %v26
  %v253 = vpop.permute.xlu0 %252
  %255 = vset.pattern.permute.xlu0 2
  %256 = vperm.xlu0 %255, %v27
  %v257 = vpop.permute.xlu0 %256
  %259 = vset.pattern.permute.xlu0 2
  %260 = vperm.xlu0 %259, %v28
  %v261 = vpop.permute.xlu0 %260
  %263 = vset.pattern.permute.xlu0 2
  %264 = vperm.xlu0 %263, %v29
  %v265 = vpop.permute.xlu0 %264
  %267 = vset.pattern.permute.xlu0 2
  %268 = vperm.xlu0 %267, %v30
  %v269 = vpop.permute.xlu0 %268
  %271 = vset.pattern.permute.xlu0 2
  %272 = vperm.xlu0 %271, %v31
  %v273 = vpop.permute.xlu0 %272
  %275 = vset.pattern.permute.xlu0 2
  %276 = vperm.xlu0 %275, %v32
  %v277 = vpop.permute.xlu0 %276
  %279 = vset.pattern.permute.xlu0 2
  %280 = vperm.xlu0 %279, %v33
  %v281 = vpop.permute.xlu0 %280
  %283 = vset.pattern.permute.xlu0 2
  %284 = vperm.xlu0 %283, %v34
  %v285 = vpop.permute.xlu0 %284
  %287 = vset.pattern.permute.xlu0 2
  %288 = vperm.xlu0 %287, %v35
  %v289 = vpop.permute.xlu0 %288
  %291 = vset.pattern.permute.xlu0 2
  %292 = vperm.xlu0 %291, %v36
  %v293 = vpop.permute.xlu0 %292
  %v295 = vperm.slane %v20, 2
  %v296 = vmul.f32 %v233, %v295
  %v297 = vmul.f32 %v237, %v295
  %v298 = vmul.f32 %v241, %v295
  %v299 = vmul.f32 %v245, %v295
  %v300 = vmul.f32 %v249, %v295
  %v301 = vmul.f32 %v253, %v295
  %v302 = vmul.f32 %v257, %v295
  %v303 = vmul.f32 %v261, %v295
  %v304 = vmul.f32 %v265, %v295
  %v305 = vmul.f32 %v269, %v295
  %v306 = vmul.f32 %v273, %v295
  %v307 = vmul.f32 %v277, %v295
  %v308 = vmul.f32 %v281, %v295
  %v309 = vmul.f32 %v285, %v295
  %v310 = vmul.f32 %v289, %v295
  %v311 = vmul.f32 %v293, %v295
  %v312 = vadd.f32 %v215, %v296
  %v313 = vadd.f32 %v216, %v297
  %v314 = vadd.f32 %v217, %v298
  %v315 = vadd.f32 %v218, %v299
  %v316 = vadd.f32 %v219, %v300
  %v317 = vadd.f32 %v220, %v301
  %v318 = vadd.f32 %v221, %v302
  %v319 = vadd.f32 %v222, %v303
  %v320 = vadd.f32 %v223, %v304
  %v321 = vadd.f32 %v224, %v305
  %v322 = vadd.f32 %v225, %v306
  %v323 = vadd.f32 %v226, %v307
  %v324 = vadd.f32 %v227, %v308
  %v325 = vadd.f32 %v228, %v309
  %v326 = vadd.f32 %v229, %v310
  %v327 = vadd.f32 %v230, %v311
  %328 = vset.pattern.permute.xlu0 3
  %329 = vperm.xlu0 %328, %v21
  %v330 = vpop.permute.xlu0 %329
  %332 = vset.pattern.permute.xlu0 3
  %333 = vperm.xlu0 %332, %v22
  %v334 = vpop.permute.xlu0 %333
  %336 = vset.pattern.permute.xlu0 3
  %337 = vperm.xlu0 %336, %v23
  %v338 = vpop.permute.xlu0 %337
  %340 = vset.pattern.permute.xlu0 3
  %341 = vperm.xlu0 %340, %v24
  %v342 = vpop.permute.xlu0 %341
  %344 = vset.pattern.permute.xlu0 3
  %345 = vperm.xlu0 %344, %v25
  %v346 = vpop.permute.xlu0 %345
  %348 = vset.pattern.permute.xlu0 3
  %349 = vperm.xlu0 %348, %v26
  %v350 = vpop.permute.xlu0 %349
  %352 = vset.pattern.permute.xlu0 3
  %353 = vperm.xlu0 %352, %v27
  %v354 = vpop.permute.xlu0 %353
  %356 = vset.pattern.permute.xlu0 3
  %357 = vperm.xlu0 %356, %v28
  %v358 = vpop.permute.xlu0 %357
  %360 = vset.pattern.permute.xlu0 3
  %361 = vperm.xlu0 %360, %v29
  %v362 = vpop.permute.xlu0 %361
  %364 = vset.pattern.permute.xlu0 3
  %365 = vperm.xlu0 %364, %v30
  %v366 = vpop.permute.xlu0 %365
  %368 = vset.pattern.permute.xlu0 3
  %369 = vperm.xlu0 %368, %v31
  %v370 = vpop.permute.xlu0 %369
  %372 = vset.pattern.permute.xlu0 3
  %373 = vperm.xlu0 %372, %v32
  %v374 = vpop.permute.xlu0 %373
  %376 = vset.pattern.permute.xlu0 3
  %377 = vperm.xlu0 %376, %v33
  %v378 = vpop.permute.xlu0 %377
  %380 = vset.pattern.permute.xlu0 3
  %381 = vperm.xlu0 %380, %v34
  %v382 = vpop.permute.xlu0 %381
  %384 = vset.pattern.permute.xlu0 3
  %385 = vperm.xlu0 %384, %v35
  %v386 = vpop.permute.xlu0 %385
  %388 = vset.pattern.permute.xlu0 3
  %389 = vperm.xlu0 %388, %v36
  %v390 = vpop.permute.xlu0 %389
  %v392 = vperm.slane %v20, 3
  %v393 = vmul.f32 %v330, %v392
  %v394 = vmul.f32 %v334, %v392
  %v395 = vmul.f32 %v338, %v392
  %v396 = vmul.f32 %v342, %v392
  %v397 = vmul.f32 %v346, %v392
  %v398 = vmul.f32 %v350, %v392
  %v399 = vmul.f32 %v354, %v392
  %v400 = vmul.f32 %v358, %v392
  %v401 = vmul.f32 %v362, %v392
  %v402 = vmul.f32 %v366, %v392
  %v403 = vmul.f32 %v370, %v392
  %v404 = vmul.f32 %v374, %v392
  %v405 = vmul.f32 %v378, %v392
  %v406 = vmul.f32 %v382, %v392
  %v407 = vmul.f32 %v386, %v392
  %v408 = vmul.f32 %v390, %v392
  %v409 = vadd.f32 %v312, %v393
  %v410 = vadd.f32 %v313, %v394
  %v411 = vadd.f32 %v314, %v395
  %v412 = vadd.f32 %v315, %v396
  %v413 = vadd.f32 %v316, %v397
  %v414 = vadd.f32 %v317, %v398
  %v415 = vadd.f32 %v318, %v399
  %v416 = vadd.f32 %v319, %v400
  %v417 = vadd.f32 %v320, %v401
  %v418 = vadd.f32 %v321, %v402
  %v419 = vadd.f32 %v322, %v403
  %v420 = vadd.f32 %v323, %v404
  %v421 = vadd.f32 %v324, %v405
  %v422 = vadd.f32 %v325, %v406
  %v423 = vadd.f32 %v326, %v407
  %v424 = vadd.f32 %v327, %v408
  %v425 = vld [vmem:[%s2] sm:$0xff]
  %v426 = vld [vmem:[%s2 + $0x8] sm:$0xff]
  %v427 = vld [vmem:[%s2 + $0x10] sm:$0xff]
  %v428 = vld [vmem:[%s2 + $0x18] sm:$0xff]
  %v429 = vld [vmem:[%s2 + $0x20] sm:$0xff]
  %v430 = vld [vmem:[%s2 + $0x28] sm:$0xff]
  %v431 = vld [vmem:[%s2 + $0x30] sm:$0xff]
  %v432 = vld [vmem:[%s2 + $0x38] sm:$0xff]
  %v433 = vld [vmem:[%s2 + $0x40] sm:$0xff]
  %v434 = vld [vmem:[%s2 + $0x48] sm:$0xff]
  %v435 = vld [vmem:[%s2 + $0x50] sm:$0xff]
  %v436 = vld [vmem:[%s2 + $0x58] sm:$0xff]
  %v437 = vld [vmem:[%s2 + $0x60] sm:$0xff]
  %v438 = vld [vmem:[%s2 + $0x68] sm:$0xff]
  %v439 = vld [vmem:[%s2 + $0x70] sm:$0xff]
  %v440 = vld [vmem:[%s2 + $0x78] sm:$0xff]
  %442 = vset.pattern.permute.xlu0 0
  %443 = vperm.xlu0 %442, %v425
  %v444 = vpop.permute.xlu0 %443
  %447 = vset.pattern.permute.xlu0 0
  %448 = vperm.xlu0 %447, %v426
  %v449 = vpop.permute.xlu0 %448
  %452 = vset.pattern.permute.xlu0 0
  %453 = vperm.xlu0 %452, %v427
  %v454 = vpop.permute.xlu0 %453
  %457 = vset.pattern.permute.xlu0 0
  %458 = vperm.xlu0 %457, %v428
  %v459 = vpop.permute.xlu0 %458
  %462 = vset.pattern.permute.xlu0 0
  %463 = vperm.xlu0 %462, %v429
  %v464 = vpop.permute.xlu0 %463
  %467 = vset.pattern.permute.xlu0 0
  %468 = vperm.xlu0 %467, %v430
  %v469 = vpop.permute.xlu0 %468
  %472 = vset.pattern.permute.xlu0 0
  %473 = vperm.xlu0 %472, %v431
  %v474 = vpop.permute.xlu0 %473
  %477 = vset.pattern.permute.xlu0 0
  %478 = vperm.xlu0 %477, %v432
  %v479 = vpop.permute.xlu0 %478
  %482 = vset.pattern.permute.xlu0 0
  %483 = vperm.xlu0 %482, %v433
  %v484 = vpop.permute.xlu0 %483
  %487 = vset.pattern.permute.xlu0 0
  %488 = vperm.xlu0 %487, %v434
  %v489 = vpop.permute.xlu0 %488
  %492 = vset.pattern.permute.xlu0 0
  %493 = vperm.xlu0 %492, %v435
  %v494 = vpop.permute.xlu0 %493
  %497 = vset.pattern.permute.xlu0 0
  %498 = vperm.xlu0 %497, %v436
  %v499 = vpop.permute.xlu0 %498
  %502 = vset.pattern.permute.xlu0 0
  %503 = vperm.xlu0 %502, %v437
  %v504 = vpop.permute.xlu0 %503
  %507 = vset.pattern.permute.xlu0 0
  %508 = vperm.xlu0 %507, %v438
  %v509 = vpop.permute.xlu0 %508
  %512 = vset.pattern.permute.xlu0 0
  %513 = vperm.xlu0 %512, %v439
  %v514 = vpop.permute.xlu0 %513
  %517 = vset.pattern.permute.xlu0 0
  %518 = vperm.xlu0 %517, %v440
  %v519 = vpop.permute.xlu0 %518
  %v521 = vadd.f32 %v409, %v444
  %v522 = vadd.f32 %v410, %v449
  %v523 = vadd.f32 %v411, %v454
  %v524 = vadd.f32 %v412, %v459
  %v525 = vadd.f32 %v413, %v464
  %v526 = vadd.f32 %v414, %v469
  %v527 = vadd.f32 %v415, %v474
  %v528 = vadd.f32 %v416, %v479
  %v529 = vadd.f32 %v417, %v484
  %v530 = vadd.f32 %v418, %v489
  %v531 = vadd.f32 %v419, %v494
  %v532 = vadd.f32 %v420, %v499
  %v533 = vadd.f32 %v421, %v504
  %v534 = vadd.f32 %v422, %v509
  %v535 = vadd.f32 %v423, %v514
  %v536 = vadd.f32 %v424, %v519
  %v537 = vmax.f32 %v521, 0.0
  %v538 = vmax.f32 %v522, 0.0
  %v539 = vmax.f32 %v523, 0.0
  %v540 = vmax.f32 %v524, 0.0
  %v541 = vmax.f32 %v525, 0.0
  %v542 = vmax.f32 %v526, 0.0
  %v543 = vmax.f32 %v527, 0.0
  %v544 = vmax.f32 %v528, 0.0
  %v545 = vmax.f32 %v529, 0.0
  %v546 = vmax.f32 %v530, 0.0
  %v547 = vmax.f32 %v531, 0.0
  %v548 = vmax.f32 %v532, 0.0
  %v549 = vmax.f32 %v533, 0.0
  %v550 = vmax.f32 %v534, 0.0
  %v551 = vmax.f32 %v535, 0.0
  %v552 = vmax.f32 %v536, 0.0
  %v553 = vld [vmem:[%s3] sm:$0xf]
  %v554 = vpack.c.bf16 %v538, %v537
  %v555 = vpack.c.bf16 %v540, %v539
  %v556 = vpack.c.bf16 %v542, %v541
  %v557 = vpack.c.bf16 %v544, %v543
  %v558 = vpack.c.bf16 %v546, %v545
  %v559 = vpack.c.bf16 %v548, %v547
  %v560 = vpack.c.bf16 %v550, %v549
  %v561 = vpack.c.bf16 %v552, %v551
  %v562 = vld [vmem:[%s4] sm:$0xff]
  %564 = vset.pattern.permute.xlu0 0
  %565 = vperm.xlu0 %564, %v562
  %v566 = vpop.permute.xlu0 %565
  %568 = vmatpush.bf16.msra.mxu0 %v561
  %569 = vmatpush.bf16.msra.mxu0 %v560
  %570 = vmatpush.bf16.msra.mxu0 %v559
  %571 = vmatpush.bf16.msra.mxu0 %v558
  %572 = vmatpush.bf16.msra.mxu0 %v557
  %573 = vmatpush.bf16.msra.mxu0 %v556
  %574 = vmatpush.bf16.msra.mxu0 %v555
  %575 = vmatpush.bf16.msra.mxu0 %v554
  %576 = vmatmul.bf16.gmra.mxu0 %v553
  %v577 = vpop.f32.mrf.mxu0
  %v578 = vadd.f32 %v566, %v577
  %v579 = vpop.f32.mrf.mxu0
  %580 = vdwg.mxu0
  %581 = vst [vmem:[%s5] sm:$0xff] %v578
  // Predicated region
  $region22: #{qnet_forward.1} parent=0 // pred_check
    _
  $region23: #{qnet_forward.1} parent=0 // pred_check_branch
    %583 = sbr.rel (0) target = $region25
  $region24: #{qnet_forward.1} parent=0 // pred_region
    _
  $region25: #{qnet_forward.1} parent=0 // pred_fallthru
    _
  // Predicated region
  $region26: #{qnet_forward.1} parent=0 // pred_check
    _
  $region27: #{qnet_forward.1} parent=0 // pred_check_branch
    %585 = sbr.rel (0) target = $region29
  $region28: #{qnet_forward.1} parent=0 // pred_region
    _
  $region29: #{qnet_forward.1} parent=0 // pred_fallthru
    _

</llo_original>
